<compile_context>
chip_gen: v7x
topology: tpu7x:2x2x1
jax: 0.10.0
libtpu: 0.0.40
codegen_flags: <defaults>
</compile_context>

<pallas_src>
import jax
import jax.numpy as jnp
from jax.experimental import pallas as pl
from jax.experimental.pallas import tpu as pltpu

# ---------------- config (continuous policy) ----------------
STATE_DIM  = 12
N_SKILLS   = 4
HIDDEN_DIM = 32
ACTION_DIM = 4
N_LAYERS   = 2          # number of hidden layers in Net
DISCRETE   = False
IN_DIM     = STATE_DIM + N_SKILLS
OUT_DIM    = ACTION_DIM if DISCRETE else 2 * ACTION_DIM

DEFAULT_PACK     = 8      # rows folded into lanes (4 on v5e, 8 on v6e, 8-16 on v7x)
DEFAULT_TILE_CAP = 8192   # max rows per grid step (~8 MiB VMEM incl. double buffers)


# ---------------- kernel ----------------
def _policy_kernel(sp_ref, zp_ref, w1s_ref, w1z_ref, b1_ref,
                   w2_ref, b2_ref, w3m_ref, b3m_ref, w3s_ref, b3s_ref,
                   mu_ref, sg_ref):
    """Whole MLP + heads for one batch tile.

    All refs hold the row-packed layout: every VMEM row carries P logical batch
    rows side-by-side in the lane dimension; the weights are block-diagonal
    (kron(I_P, W)) so ordinary dense matmuls implement the per-row MLP exactly.
    """
    # hidden layer 1: "concat" fused into two split-weight matmuls (no concat in HBM)
    h = (jnp.dot(sp_ref[...], w1s_ref[...], preferred_element_type=jnp.float32)
         + jnp.dot(zp_ref[...], w1z_ref[...], preferred_element_type=jnp.float32)
         + b1_ref[...])
    h = jnp.maximum(h, 0.0)                                 # ReLU (dropout = identity)

    # hidden layer 2: Linear + ReLU
    h = jnp.dot(h, w2_ref[...], preferred_element_type=jnp.float32) + b2_ref[...]
    h = jnp.maximum(h, 0.0)

    # output heads (separate block-diag weights -> no post-kernel column slicing)
    mu = jnp.dot(h, w3m_ref[...], preferred_element_type=jnp.float32) + b3m_ref[...]
    sg = jnp.dot(h, w3s_ref[...], preferred_element_type=jnp.float32) + b3s_ref[...]
    mu_ref[...] = jnp.tanh(mu).astype(mu_ref.dtype)
    sg_ref[...] = jax.nn.sigmoid(sg).astype(sg_ref.dtype)


# ---------------- parameter preparation (hoisted out of the hot path) ----------------
def prepare_params(params, pack=DEFAULT_PACK):
    """One-time expansion of the MLP weights into the row-packed (block-diagonal) form."""
    w1, b1, w2, b2, w3, b3 = params
    w1s, w1z = w1[:STATE_DIM], w1[STATE_DIM:]            # fused concat -> split weights
    w3m, w3s = w3[:, :ACTION_DIM], w3[:, ACTION_DIM:]    # mu / log-sigma heads
    b3m, b3s = b3[:, :ACTION_DIM], b3[:, ACTION_DIM:]

    bd   = lambda w: jnp.kron(jnp.eye(pack, dtype=w.dtype), w)   # block-diagonal
    tile = lambda b: jnp.tile(b, (1, pack))                      # per-row bias replica

    return dict(pack=pack,
                w1s=bd(w1s), w1z=bd(w1z), b1=tile(b1),
                w2=bd(w2),   b2=tile(b2),
                w3m=bd(w3m), b3m=tile(b3m),
                w3s=bd(w3s), b3s=tile(b3s))


def _pick_tile_b(B, P, cap=DEFAULT_TILE_CAP):
    """Largest batch tile that divides B, is a multiple of 8*P (sublane constraint on
    the packed block), stays under the VMEM cap (~1 KiB/row incl. double buffering,
    so 8192 rows ~= 8 MiB — safe for v5e 16 MiB scoped / v6e-v7x 32 MiB scoped /
    v7x 64 MiB physical), and leaves >= 8 grid steps (>= 4 per v7x TensorCore)."""
    limit = min(B // 8, cap)
    step = 8 * P
    if limit < step:
        return B                      # small batch: single tile
    t = (limit // step) * step
    while t >= step:
        if B % t == 0:
            return t
        t -= step
    # TODO(synk): pathological B with no multiple-of-8P divisor -> single tile.
    return B


# ---------------- wrapper ----------------
def policy_forward(s, z, packed_params, *, tile_b=None, out_dtype=jnp.float32):
    """Returns (mus, sigmas) — the parameters of the Normal action distribution.

    `s`/`z` are streamed in whatever dtype they arrive in (f32 or bf16) — no
    wrapper-side casts (a standalone cast would add a full extra HBM pass).
    """
    B = s.shape[0]
    P = packed_params["pack"]
    assert B % P == 0, f"batch ({B}) must be a multiple of pack ({P})"

    # Free row-major views: P consecutive rows folded into the lane dimension.
    sp = s.reshape(B // P, STATE_DIM * P)
    zp = z.reshape(B // P, N_SKILLS * P)

    tb = _pick_tile_b(B, P) if tile_b is None else tile_b
    assert B % tb == 0, "tile_b must divide the batch"
    assert tb % P == 0, "tile_b must be a multiple of pack"
    assert tb == B or (tb // P) % 8 == 0, "tile_b // pack must be a multiple of 8"
    tbp = tb // P

    pp = packed_params
    grid = (B // tb,)
    tiled = lambda shape: pl.BlockSpec(shape, lambda i: (i, 0))   # batch-tiled streams
    full  = lambda arr:   pl.BlockSpec(arr.shape, lambda i: (0, 0))  # resident weights

    mu_p, sg_p = pl.pallas_call(
        _policy_kernel,
        out_shape=(jax.ShapeDtypeStruct((B // P, ACTION_DIM * P), out_dtype),
                   jax.ShapeDtypeStruct((B // P, ACTION_DIM * P), out_dtype)),
        grid=grid,
        in_specs=[
            tiled((tbp, STATE_DIM * P)),         # s (packed)
            tiled((tbp, N_SKILLS * P)),          # z (packed)
            full(pp["w1s"]), full(pp["w1z"]), full(pp["b1"]),
            full(pp["w2"]),  full(pp["b2"]),
            full(pp["w3m"]), full(pp["b3m"]),
            full(pp["w3s"]), full(pp["b3s"]),
        ],
        out_specs=(tiled((tbp, ACTION_DIM * P)),  # mus  (packed)
                   tiled((tbp, ACTION_DIM * P))), # sigmas (packed)
        compiler_params=pltpu.CompilerParams(
            dimension_semantics=("parallel",),    # shards grid across v7x's 2 TCs
            vmem_limit_bytes=32 * 1024 * 1024),   # explicit limit (raises v5e's 16 MiB default)
    )(sp, zp, pp["w1s"], pp["w1z"], pp["b1"], pp["w2"], pp["b2"],
      pp["w3m"], pp["b3m"], pp["w3s"], pp["b3s"])

    # Free row-major views back to (B, action_dim) — no extra HBM pass.
    mus    = mu_p.reshape(B, ACTION_DIM)
    sigmas = sg_p.reshape(B, ACTION_DIM)
    return mus, sigmas


# ---------------- init / reference / demo ----------------
def init_params(key):
    """Deterministic synthetic parameters (PyTorch nn.Linear-like uniform init)."""
    ks = jax.random.split(key, 6)

    def lin(kw, kb, fan_in, fan_out):
        bound = 1.0 / jnp.sqrt(fan_in)
        w = jax.random.uniform(kw, (fan_in, fan_out), jnp.float32, -bound, bound)
        b = jax.random.uniform(kb, (1, fan_out), jnp.float32, -bound, bound)
        return w, b

    w1, b1 = lin(ks[0], ks[1], IN_DIM, HIDDEN_DIM)
    w2, b2 = lin(ks[2], ks[3], HIDDEN_DIM, HIDDEN_DIM)
    w3, b3 = lin(ks[4], ks[5], HIDDEN_DIM, OUT_DIM)
    return (w1, b1, w2, b2, w3, b3)


def _reference(s, z, params):
    """Pure-JAX reference for the same forward pass (matches the PyTorch module)."""
    w1, b1, w2, b2, w3, b3 = params
    x = jnp.concatenate([s, z], axis=-1)
    h = jnp.maximum(x @ w1 + b1, 0.0)
    h = jnp.maximum(h @ w2 + b2, 0.0)
    out = h @ w3 + b3
    return jnp.tanh(out[..., :ACTION_DIM]), jax.nn.sigmoid(out[..., ACTION_DIM:])


if __name__ == "__main__":
    key = jax.random.PRNGKey(0)
    k_s, k_z, k_p = jax.random.split(key, 3)
    raw_params = init_params(k_p)
    packed_params = prepare_params(raw_params, pack=DEFAULT_PACK)   # hoisted, done once

    # --- small single-tile case (B = 8) ---
    B = 8
    s = jax.random.normal(k_s, (B, STATE_DIM), jnp.float32)
    z = jax.random.normal(k_z, (B, N_SKILLS), jnp.float32)
    mus, sigmas = policy_forward(s, z, packed_params)
    jax.block_until_ready((mus, sigmas))
    ref_mu, ref_sig = _reference(s, z, raw_params)
    assert mus.shape == (B, ACTION_DIM) and sigmas.shape == (B, ACTION_DIM)
    assert jnp.allclose(mus, ref_mu, atol=1e-5, rtol=1e-5)
    assert jnp.allclose(sigmas, ref_sig, atol=1e-5, rtol=1e-5)

    # --- multi-tile case (B = 256, tile_b = 64 -> 4 grid steps, exercises pipelining) ---
    B2 = 256
    s2 = jax.random.normal(jax.random.PRNGKey(1), (B2, STATE_DIM), jnp.float32)
    z2 = jax.random.normal(jax.random.PRNGKey(2), (B2, N_SKILLS), jnp.float32)
    mus2, sigmas2 = policy_forward(s2, z2, packed_params, tile_b=64)
    jax.block_until_ready((mus2, sigmas2))
    ref_mu2, ref_sig2 = _reference(s2, z2, raw_params)
    assert jnp.allclose(mus2, ref_mu2, atol=1e-5, rtol=1e-5)
    assert jnp.allclose(sigmas2, ref_sig2, atol=1e-5, rtol=1e-5)

    # --- bf16 output option (halves the writeback stream), loose tolerance ---
    mus3, sigmas3 = policy_forward(s2, z2, packed_params, tile_b=64,
                                   out_dtype=jnp.bfloat16)
    jax.block_until_ready((mus3, sigmas3))
    assert jnp.allclose(mus3.astype(jnp.float32), ref_mu2, atol=2e-2, rtol=2e-2)
    assert jnp.allclose(sigmas3.astype(jnp.float32), ref_sig2, atol=2e-2, rtol=2e-2)

    print("KERNEL_OK")
</pallas_src>

<mosaic_0001>
module attributes {stable_mosaic.version = 11 : i64} {
  func.func @_policy_kernel(%arg0: i32, %arg1: memref<1x96xf32, #tpu.memory_space<vmem>>, %arg2: memref<1x32xf32, #tpu.memory_space<vmem>>, %arg3: memref<96x256xf32, #tpu.memory_space<vmem>>, %arg4: memref<32x256xf32, #tpu.memory_space<vmem>>, %arg5: memref<1x256xf32, #tpu.memory_space<vmem>>, %arg6: memref<256x256xf32, #tpu.memory_space<vmem>>, %arg7: memref<1x256xf32, #tpu.memory_space<vmem>>, %arg8: memref<256x32xf32, #tpu.memory_space<vmem>>, %arg9: memref<1x32xf32, #tpu.memory_space<vmem>>, %arg10: memref<256x32xf32, #tpu.memory_space<vmem>>, %arg11: memref<1x32xf32, #tpu.memory_space<vmem>>, %arg12: memref<1x32xf32, #tpu.memory_space<vmem>>, %arg13: memref<1x32xf32, #tpu.memory_space<vmem>>) attributes {dimension_semantics = [#tpu.dimension_semantics<parallel>], iteration_bounds = array<i64: 1>, scalar_prefetch = 0 : i64, scratch_operands = 0 : i64, tpu.core_type = #tpu.core_type<tc>, window_params = [{transform_indices = @transform_0, window_bounds = array<i64: 1, 96>}, {transform_indices = @transform_1, window_bounds = array<i64: 1, 32>}, {pipeline_mode = #tpu.pipeline_mode<synchronous>, transform_indices = @transform_2, window_bounds = array<i64: 96, 256>}, {pipeline_mode = #tpu.pipeline_mode<synchronous>, transform_indices = @transform_3, window_bounds = array<i64: 32, 256>}, {pipeline_mode = #tpu.pipeline_mode<synchronous>, transform_indices = @transform_4, window_bounds = array<i64: 1, 256>}, {pipeline_mode = #tpu.pipeline_mode<synchronous>, transform_indices = @transform_5, window_bounds = array<i64: 256, 256>}, {pipeline_mode = #tpu.pipeline_mode<synchronous>, transform_indices = @transform_6, window_bounds = array<i64: 1, 256>}, {pipeline_mode = #tpu.pipeline_mode<synchronous>, transform_indices = @transform_7, window_bounds = array<i64: 256, 32>}, {pipeline_mode = #tpu.pipeline_mode<synchronous>, transform_indices = @transform_8, window_bounds = array<i64: 1, 32>}, {pipeline_mode = #tpu.pipeline_mode<synchronous>, transform_indices = @transform_9, window_bounds = array<i64: 256, 32>}, {pipeline_mode = #tpu.pipeline_mode<synchronous>, transform_indices = @transform_10, window_bounds = array<i64: 1, 32>}, {transform_indices = @transform_11, window_bounds = array<i64: 1, 32>}, {transform_indices = @transform_12, window_bounds = array<i64: 1, 32>}]} {
    %c0 = arith.constant 0 : index
    %c0_0 = arith.constant 0 : index
    %0 = vector.load %arg1[%c0, %c0_0] : memref<1x96xf32, #tpu.memory_space<vmem>>, vector<1x96xf32>
    %c0_1 = arith.constant 0 : index
    %c0_2 = arith.constant 0 : index
    %1 = vector.load %arg3[%c0_1, %c0_2] : memref<96x256xf32, #tpu.memory_space<vmem>>, vector<96x256xf32>
    %cst = arith.constant dense<0.000000e+00> : vector<1x256xf32>
    %2 = tpu.matmul %0, %1, %cst {dimension_numbers = #tpu.dot_dimension_numbers<[1], [0], [0], [1], [0, 0, 1, 1], [], []>} : vector<1x96xf32>, vector<96x256xf32>, vector<1x256xf32> -> vector<1x256xf32>
    %c0_3 = arith.constant 0 : index
    %c0_4 = arith.constant 0 : index
    %3 = vector.load %arg2[%c0_3, %c0_4] : memref<1x32xf32, #tpu.memory_space<vmem>>, vector<1x32xf32>
    %c0_5 = arith.constant 0 : index
    %c0_6 = arith.constant 0 : index
    %4 = vector.load %arg4[%c0_5, %c0_6] : memref<32x256xf32, #tpu.memory_space<vmem>>, vector<32x256xf32>
    %cst_7 = arith.constant dense<0.000000e+00> : vector<1x256xf32>
    %5 = tpu.matmul %3, %4, %cst_7 {dimension_numbers = #tpu.dot_dimension_numbers<[1], [0], [0], [1], [0, 0, 1, 1], [], []>} : vector<1x32xf32>, vector<32x256xf32>, vector<1x256xf32> -> vector<1x256xf32>
    %6 = arith.addf %2, %5 : vector<1x256xf32>
    %c0_8 = arith.constant 0 : index
    %c0_9 = arith.constant 0 : index
    %7 = vector.load %arg5[%c0_8, %c0_9] : memref<1x256xf32, #tpu.memory_space<vmem>>, vector<1x256xf32>
    %8 = arith.addf %6, %7 : vector<1x256xf32>
    %cst_10 = arith.constant 0.000000e+00 : f32
    %9 = vector.broadcast %cst_10 : f32 to vector<1x256xf32>
    %10 = arith.maximumf %8, %9 : vector<1x256xf32>
    %c0_11 = arith.constant 0 : index
    %c0_12 = arith.constant 0 : index
    %11 = vector.load %arg6[%c0_11, %c0_12] : memref<256x256xf32, #tpu.memory_space<vmem>>, vector<256x256xf32>
    %cst_13 = arith.constant dense<0.000000e+00> : vector<1x256xf32>
    %12 = tpu.matmul %10, %11, %cst_13 {dimension_numbers = #tpu.dot_dimension_numbers<[1], [0], [0], [1], [0, 0, 1, 1], [], []>} : vector<1x256xf32>, vector<256x256xf32>, vector<1x256xf32> -> vector<1x256xf32>
    %c0_14 = arith.constant 0 : index
    %c0_15 = arith.constant 0 : index
    %13 = vector.load %arg7[%c0_14, %c0_15] : memref<1x256xf32, #tpu.memory_space<vmem>>, vector<1x256xf32>
    %14 = arith.addf %12, %13 : vector<1x256xf32>
    %cst_16 = arith.constant 0.000000e+00 : f32
    %15 = vector.broadcast %cst_16 : f32 to vector<1x256xf32>
    %16 = arith.maximumf %14, %15 : vector<1x256xf32>
    %c0_17 = arith.constant 0 : index
    %c0_18 = arith.constant 0 : index
    %17 = vector.load %arg8[%c0_17, %c0_18] : memref<256x32xf32, #tpu.memory_space<vmem>>, vector<256x32xf32>
    %cst_19 = arith.constant dense<0.000000e+00> : vector<1x32xf32>
    %18 = tpu.matmul %16, %17, %cst_19 {dimension_numbers = #tpu.dot_dimension_numbers<[1], [0], [0], [1], [0, 0, 1, 1], [], []>} : vector<1x256xf32>, vector<256x32xf32>, vector<1x32xf32> -> vector<1x32xf32>
    %c0_20 = arith.constant 0 : index
    %c0_21 = arith.constant 0 : index
    %19 = vector.load %arg9[%c0_20, %c0_21] : memref<1x32xf32, #tpu.memory_space<vmem>>, vector<1x32xf32>
    %20 = arith.addf %18, %19 : vector<1x32xf32>
    %c0_22 = arith.constant 0 : index
    %c0_23 = arith.constant 0 : index
    %21 = vector.load %arg10[%c0_22, %c0_23] : memref<256x32xf32, #tpu.memory_space<vmem>>, vector<256x32xf32>
    %cst_24 = arith.constant dense<0.000000e+00> : vector<1x32xf32>
    %22 = tpu.matmul %16, %21, %cst_24 {dimension_numbers = #tpu.dot_dimension_numbers<[1], [0], [0], [1], [0, 0, 1, 1], [], []>} : vector<1x256xf32>, vector<256x32xf32>, vector<1x32xf32> -> vector<1x32xf32>
    %c0_25 = arith.constant 0 : index
    %c0_26 = arith.constant 0 : index
    %23 = vector.load %arg11[%c0_25, %c0_26] : memref<1x32xf32, #tpu.memory_space<vmem>>, vector<1x32xf32>
    %24 = arith.addf %22, %23 : vector<1x32xf32>
    %25 = math.tanh %20 : vector<1x32xf32>
    %c0_27 = arith.constant 0 : index
    %c0_28 = arith.constant 0 : index
    %26 = vector.load %arg12[%c0_27, %c0_28] : memref<1x32xf32, #tpu.memory_space<vmem>>, vector<1x32xf32>
    tpu.vector_store %arg12[%c0_27, %c0_28], %25 {strides = array<i32>} : memref<1x32xf32, #tpu.memory_space<vmem>>, vector<1x32xf32>,
    %27 = arith.negf %24 : vector<1x32xf32>
    %28 = math.exp %27 : vector<1x32xf32>
    %cst_29 = arith.constant 1.000000e+00 : f32
    %29 = vector.broadcast %cst_29 : f32 to vector<1x32xf32>
    %30 = arith.addf %29, %28 : vector<1x32xf32>
    %31 = arith.divf %29, %30 : vector<1x32xf32>
    %c0_30 = arith.constant 0 : index
    %c0_31 = arith.constant 0 : index
    %32 = vector.load %arg13[%c0_30, %c0_31] : memref<1x32xf32, #tpu.memory_space<vmem>>, vector<1x32xf32>
    tpu.vector_store %arg13[%c0_30, %c0_31], %31 {strides = array<i32>} : memref<1x32xf32, #tpu.memory_space<vmem>>, vector<1x32xf32>,
    return
  }
  func.func @transform_0(%arg0: i32) -> (i32, i32) {
    %c0_i32 = arith.constant 0 : i32
    %c0_i32_0 = arith.constant 0 : i32
    return %arg0, %c0_i32 : i32, i32
  }
  func.func @transform_1(%arg0: i32) -> (i32, i32) {
    %c0_i32 = arith.constant 0 : i32
    %c0_i32_0 = arith.constant 0 : i32
    return %arg0, %c0_i32 : i32, i32
  }
  func.func @transform_2(%arg0: i32) -> (i32, i32) {
    %c0_i32 = arith.constant 0 : i32
    %c0_i32_0 = arith.constant 0 : i32
    %c0_i32_1 = arith.constant 0 : i32
    return %c0_i32, %c0_i32_0 : i32, i32
  }
  func.func @transform_3(%arg0: i32) -> (i32, i32) {
    %c0_i32 = arith.constant 0 : i32
    %c0_i32_0 = arith.constant 0 : i32
    %c0_i32_1 = arith.constant 0 : i32
    return %c0_i32, %c0_i32_0 : i32, i32
  }
  func.func @transform_4(%arg0: i32) -> (i32, i32) {
    %c0_i32 = arith.constant 0 : i32
    %c0_i32_0 = arith.constant 0 : i32
    %c0_i32_1 = arith.constant 0 : i32
    return %c0_i32, %c0_i32_0 : i32, i32
  }
  func.func @transform_5(%arg0: i32) -> (i32, i32) {
    %c0_i32 = arith.constant 0 : i32
    %c0_i32_0 = arith.constant 0 : i32
    %c0_i32_1 = arith.constant 0 : i32
    return %c0_i32, %c0_i32_0 : i32, i32
  }
  func.func @transform_6(%arg0: i32) -> (i32, i32) {
    %c0_i32 = arith.constant 0 : i32
    %c0_i32_0 = arith.constant 0 : i32
    %c0_i32_1 = arith.constant 0 : i32
    return %c0_i32, %c0_i32_0 : i32, i32
  }
  func.func @transform_7(%arg0: i32) -> (i32, i32) {
    %c0_i32 = arith.constant 0 : i32
    %c0_i32_0 = arith.constant 0 : i32
    %c0_i32_1 = arith.constant 0 : i32
    return %c0_i32, %c0_i32_0 : i32, i32
  }
  func.func @transform_8(%arg0: i32) -> (i32, i32) {
    %c0_i32 = arith.constant 0 : i32
    %c0_i32_0 = arith.constant 0 : i32
    %c0_i32_1 = arith.constant 0 : i32
    return %c0_i32, %c0_i32_0 : i32, i32
  }
  func.func @transform_9(%arg0: i32) -> (i32, i32) {
    %c0_i32 = arith.constant 0 : i32
    %c0_i32_0 = arith.constant 0 : i32
    %c0_i32_1 = arith.constant 0 : i32
    return %c0_i32, %c0_i32_0 : i32, i32
  }
  func.func @transform_10(%arg0: i32) -> (i32, i32) {
    %c0_i32 = arith.constant 0 : i32
    %c0_i32_0 = arith.constant 0 : i32
    %c0_i32_1 = arith.constant 0 : i32
    return %c0_i32, %c0_i32_0 : i32, i32
  }
  func.func @transform_11(%arg0: i32) -> (i32, i32) {
    %c0_i32 = arith.constant 0 : i32
    %c0_i32_0 = arith.constant 0 : i32
    return %arg0, %c0_i32 : i32, i32
  }
  func.func @transform_12(%arg0: i32) -> (i32, i32) {
    %c0_i32 = arith.constant 0 : i32
    %c0_i32_0 = arith.constant 0 : i32
    return %arg0, %c0_i32 : i32, i32
  }
}

</mosaic_0001>

<llo_original>
// kernel: tpu_custom_call.1
$region0: #{tpu_custom_call.1}
  #allocation0 [shape = 'u32[]', space=smem, size = 0x4, offset = 0x4, fixed_abs, tag = 'smem constant byte address 0x4 - core index']
  #allocation1 [shape = 'u32[144,128]{1,0:T(1,128)}', space=vmem, size = 0x12000, scoped, tag = 'internal scratch']
  %s0 = inlined_call_operand.vmem [shape: f32[1,96], index: 0, kind: input, shape index: {}]
  %s1 = inlined_call_operand.vmem [shape: f32[1,32], index: 1, kind: input, shape index: {}]
  %s2 = inlined_call_operand.hbm [shape: f32[96,256], index: 2, kind: input, shape index: {}]
  %s3 = inlined_call_operand.vmem [shape: f32[32,256], index: 3, kind: input, shape index: {}]
  %s4 = inlined_call_operand.vmem [shape: f32[1,256], index: 4, kind: input, shape index: {}]
  %s5 = inlined_call_operand.vmem [shape: f32[256,256], index: 5, kind: input, shape index: {}]
  %s6 = inlined_call_operand.vmem [shape: f32[1,256], index: 6, kind: input, shape index: {}]
  %s7 = inlined_call_operand.vmem [shape: f32[256,32], index: 7, kind: input, shape index: {}]
  %s8 = inlined_call_operand.vmem [shape: f32[1,32], index: 8, kind: input, shape index: {}]
  %s9 = inlined_call_operand.vmem [shape: f32[256,32], index: 9, kind: input, shape index: {}]
  %s10 = inlined_call_operand.vmem [shape: f32[1,32], index: 10, kind: input, shape index: {}]
  %s11 = inlined_call_operand.hbm [shape: f32[1,32], index: 11, kind: output, shape index: {0}]
  %s12 = inlined_call_operand.hbm [shape: f32[1,32], index: 12, kind: output, shape index: {1}]
  %13 = xla_tuple %s11, %s12
  %s14 = sld [smem:[#allocation0]]
  $region66: #{tpu_custom_call.1} parent=0
    _
  %s16 = ssub.s32 1, %s14
  %s17 = scalar_select 0, %s16, %s14
  $region1: #{tpu_custom_call.1} parent=0
    #allocation2 [shape = 'u8[98304]{0}', space=vmem, size = 0x18000, scoped, tag = 'input window, operand 2, single buffered']
    #allocation3 [shape = 's32[1]{0}', space=sflag, size = 0x4, scoped, tag = 'scoped memory for tpu_custom_call.1']
    #allocation4 [shape = 's32[1]{0}', space=sflag, size = 0x4, scoped, tag = 'scoped memory for tpu_custom_call.1']
    #allocation5 [shape = 'u8[512]{0}', space=vmem, size = 0x400, scoped, tag = 'output window, operand 0, single buffered']
    #allocation6 [shape = 'u8[512]{0}', space=vmem, size = 0x400, scoped, tag = 'output window, operand 1, single buffered']
    #allocation7 [shape = 's32[1]{0}', space=sflag, size = 0x4, scoped, tag = 'scoped memory for tpu_custom_call.1']
    %18 = vsyncpa [#allocation3], 0
    %19 = vsyncpa [#allocation4], 0
    %20 = vsyncpa [#allocation7], 0
    // Predicated region
    $region2: #{tpu_custom_call.1} parent=1 // pred_check
      _
    $region3: #{tpu_custom_call.1} parent=1 // pred_check_branch
      %22 = sbr.rel (0) target = $region5
    $region4: #{tpu_custom_call.1} parent=1 // pred_region
      _
    $region5: #{tpu_custom_call.1} parent=1 // pred_fallthru
      _
    // Predicated region
    $region6: #{tpu_custom_call.1} parent=1 // pred_check
      _
    $region7: #{tpu_custom_call.1} parent=1 // pred_check_branch
      %24 = sbr.rel (0) target = $region9
    $region8: #{tpu_custom_call.1} parent=1 // pred_region
      _
    $region9: #{tpu_custom_call.1} parent=1 // pred_fallthru
      _
    // Predicated region
    $region10: #{tpu_custom_call.1} parent=1 // pred_check
      _
    $region11: #{tpu_custom_call.1} parent=1 // pred_check_branch
      %26 = sbr.rel (0) target = $region13
    $region12: #{tpu_custom_call.1} parent=1 // pred_region
      %s28 = ssub.s32 3072, 3072
      %29 = vsyncadd [#allocation3], %s28
      %s30 = sshll.u32 [#allocation2], 4
      %s31 = int_to_ptr.vmem [resolvable:$true] %s30
      %36 = dma.hbm_to_vmem [thread:$0]  %s2, 3072, %s31, [#allocation3], 256, 256, 16
    $region13: #{tpu_custom_call.1} parent=1 // pred_fallthru
      _
    // Predicated region
    $region14: #{tpu_custom_call.1} parent=1 // pred_check
      _
    $region15: #{tpu_custom_call.1} parent=1 // pred_check_branch
      %38 = sbr.rel (0) target = $region17
    $region16: #{tpu_custom_call.1} parent=1 // pred_region
      _
    $region17: #{tpu_custom_call.1} parent=1 // pred_fallthru
      _
    // Predicated region
    $region18: #{tpu_custom_call.1} parent=1 // pred_check
      _
    $region19: #{tpu_custom_call.1} parent=1 // pred_check_branch
      %40 = sbr.rel (0) target = $region21
    $region20: #{tpu_custom_call.1} parent=1 // pred_region
      _
    $region21: #{tpu_custom_call.1} parent=1 // pred_fallthru
      _
    // Predicated region
    $region22: #{tpu_custom_call.1} parent=1 // pred_check
      _
    $region23: #{tpu_custom_call.1} parent=1 // pred_check_branch
      %42 = sbr.rel (0) target = $region25
    $region24: #{tpu_custom_call.1} parent=1 // pred_region
      _
    $region25: #{tpu_custom_call.1} parent=1 // pred_fallthru
      _
    // Predicated region
    $region26: #{tpu_custom_call.1} parent=1 // pred_check
      _
    $region27: #{tpu_custom_call.1} parent=1 // pred_check_branch
      %44 = sbr.rel (0) target = $region29
    $region28: #{tpu_custom_call.1} parent=1 // pred_region
      _
    $region29: #{tpu_custom_call.1} parent=1 // pred_fallthru
      _
    // Predicated region
    $region30: #{tpu_custom_call.1} parent=1 // pred_check
      _
    $region31: #{tpu_custom_call.1} parent=1 // pred_check_branch
      %46 = sbr.rel (0) target = $region33
    $region32: #{tpu_custom_call.1} parent=1 // pred_region
      _
    $region33: #{tpu_custom_call.1} parent=1 // pred_fallthru
      _
    // Predicated region
    $region34: #{tpu_custom_call.1} parent=1 // pred_check
      _
    $region35: #{tpu_custom_call.1} parent=1 // pred_check_branch
      %48 = sbr.rel (0) target = $region37
    $region36: #{tpu_custom_call.1} parent=1 // pred_region
      _
    $region37: #{tpu_custom_call.1} parent=1 // pred_fallthru
      _
    // Predicated region
    $region38: #{tpu_custom_call.1} parent=1 // pred_check
      _
    $region39: #{tpu_custom_call.1} parent=1 // pred_check_branch
      %50 = sbr.rel (0) target = $region41
    $region40: #{tpu_custom_call.1} parent=1 // pred_region
      _
    $region41: #{tpu_custom_call.1} parent=1 // pred_fallthru
      _
    // Predicated region
    $region42: #{tpu_custom_call.1} parent=1 // pred_check
      _
    $region43: #{tpu_custom_call.1} parent=1 // pred_check_branch
      %52 = sbr.rel (0) target = $region45
    $region44: #{tpu_custom_call.1} parent=1 // pred_region
      _
    $region45: #{tpu_custom_call.1} parent=1 // pred_fallthru
      _
    // Predicated region
    $region46: #{tpu_custom_call.1} parent=1 // pred_check
      _
    $region47: #{tpu_custom_call.1} parent=1 // pred_check_branch
      %54 = sbr.rel (0) target = $region49
    $region48: #{tpu_custom_call.1} parent=1 // pred_region
      %55 = dma.done [#allocation3], 3072
    $region49: #{tpu_custom_call.1} parent=1 // pred_fallthru
      _
    %v56 = vld [vmem:[%s0] sm:$0x1]
    %v57 = vld [vmem:[#allocation2] sm:$0xff]
    %v58 = vld [vmem:[#allocation2 + $0x8] sm:$0xff]
    %v59 = vld [vmem:[#allocation2 + $0x10] sm:$0xff]
    %v60 = vld [vmem:[#allocation2 + $0x18] sm:$0xff]
    %v61 = vld [vmem:[#allocation2 + $0x20] sm:$0xff]
    %v62 = vld [vmem:[#allocation2 + $0x28] sm:$0xff]
    %v63 = vld [vmem:[#allocation2 + $0x30] sm:$0xff]
    %v64 = vld [vmem:[#allocation2 + $0x38] sm:$0xff]
    %v65 = vld [vmem:[#allocation2 + $0x40] sm:$0xff]
    %v66 = vld [vmem:[#allocation2 + $0x48] sm:$0xff]
    %v67 = vld [vmem:[#allocation2 + $0x50] sm:$0xff]
    %v68 = vld [vmem:[#allocation2 + $0x58] sm:$0xff]
    %v69 = vld [vmem:[#allocation2 + $0x60] sm:$0xff]
    %v70 = vld [vmem:[#allocation2 + $0x68] sm:$0xff]
    %v71 = vld [vmem:[#allocation2 + $0x70] sm:$0xff]
    %v72 = vld [vmem:[#allocation2 + $0x78] sm:$0xff]
    %v73 = vld [vmem:[#allocation2 + $0x80] sm:$0xff]
    %v74 = vld [vmem:[#allocation2 + $0x88] sm:$0xff]
    %v75 = vld [vmem:[#allocation2 + $0x90] sm:$0xff]
    %v76 = vld [vmem:[#allocation2 + $0x98] sm:$0xff]
    %v77 = vld [vmem:[#allocation2 + $0xa0] sm:$0xff]
    %v78 = vld [vmem:[#allocation2 + $0xa8] sm:$0xff]
    %v79 = vld [vmem:[#allocation2 + $0xb0] sm:$0xff]
    %v80 = vld [vmem:[#allocation2 + $0xb8] sm:$0xff]
    %v81 = vld [vmem:[%s1] sm:$0x1]
    %v82 = vld [vmem:[%s3] sm:$0xff]
    %v83 = vld [vmem:[%s3 + $0x8] sm:$0xff]
    %v84 = vld [vmem:[%s3 + $0x10] sm:$0xff]
    %v85 = vld [vmem:[%s3 + $0x18] sm:$0xff]
    %v86 = vld [vmem:[%s3 + $0x20] sm:$0xff]
    %v87 = vld [vmem:[%s3 + $0x28] sm:$0xff]
    %v88 = vld [vmem:[%s3 + $0x30] sm:$0xff]
    %v89 = vld [vmem:[%s3 + $0x38] sm:$0xff]
    %vm90 = vcmask 261120
    %v92 = vsel %vm90, %v81, 0
    %94 = vmatprep.subr.mxu0 %v83
    %95 = vmatpush1.msra.mxu0 %v82
    %96 = vmatprep.subr.mxu0 %v85
    %97 = vmatpush1.msra.mxu0 %v84
    %98 = vmatprep.subr.mxu0 %v87
    %99 = vmatpush1.msra.mxu0 %v86
    %100 = vmatprep.subr.mxu0 %v89
    %101 = vmatpush1.msra.mxu0 %v88
    %102 = vmatprep.subr.mxu0 0.0
    %103 = vmatpush1.msra.mxu0 0.0
    %104 = vmatprep.subr.mxu0 0.0
    %105 = vmatpush1.msra.mxu0 0.0
    %106 = vmatprep.subr.mxu0 0.0
    %107 = vmatpush1.msra.mxu0 0.0
    %108 = vmatprep.subr.mxu0 0.0
    %109 = vmatpush1.msra.mxu0 0.0
    %110 = vmatprep.subr.mxu0 0.0
    %111 = vmatpush1.msra.mxu0 0.0
    %112 = vmatprep.subr.mxu0 0.0
    %113 = vmatpush1.msra.mxu0 0.0
    %114 = vmatprep.subr.mxu0 0.0
    %115 = vmatpush1.msra.mxu0 0.0
    %116 = vmatprep.subr.mxu0 0.0
    %117 = vmatpush1.msra.mxu0 0.0
    %118 = vmatprep.subr.mxu0 0.0
    %119 = vmatpush1.msra.mxu0 0.0
    %120 = vmatprep.subr.mxu0 0.0
    %121 = vmatpush1.msra.mxu0 0.0
    %122 = vmatprep.subr.mxu0 0.0
    %123 = vmatpush1.msra.mxu0 0.0
    %124 = vmatprep.subr.mxu0 0.0
    %125 = vmatpush1.msra.mxu0 0.0
    %126 = vmatprep.subr.mxu0 0.0
    %127 = vmatpush1.msra.mxu0 0.0
    %128 = vmatprep.subr.mxu0 0.0
    %129 = vmatpush1.msra.mxu0 0.0
    %130 = vmatprep.subr.mxu0 0.0
    %131 = vmatpush1.msra.mxu0 0.0
    %132 = vmatprep.subr.mxu0 0.0
    %133 = vmatpush1.msra.mxu0 0.0
    %134 = vmatprep.subr.mxu0 0.0
    %135 = vmatpush1.msra.mxu0 0.0
    %136 = vmatprep.subr.mxu0 0.0
    %137 = vmatpush1.msra.mxu0 0.0
    %138 = vmatprep.subr.mxu0 0.0
    %139 = vmatpush1.msra.mxu0 0.0
    %140 = vmatprep.subr.mxu0 0.0
    %141 = vmatpush1.msra.mxu0 0.0
    %142 = vmatprep.subr.mxu0 0.0
    %143 = vmatpush1.msra.mxu0 0.0
    %144 = vmatprep.subr.mxu0 0.0
    %145 = vmatpush1.msra.mxu0 0.0
    %146 = vmatprep.subr.mxu0 0.0
    %147 = vmatpush1.msra.mxu0 0.0
    %148 = vmatprep.subr.mxu0 0.0
    %149 = vmatpush1.msra.mxu0 0.0
    %150 = vmatprep.subr.mxu0 0.0
    %151 = vmatpush1.msra.mxu0 0.0
    %152 = vmatprep.subr.mxu0 0.0
    %153 = vmatpush1.msra.mxu0 0.0
    %154 = vmatprep.subr.mxu0 0.0
    %155 = vmatpush1.msra.mxu0 0.0
    %156 = vmatprep.subr.mxu0 0.0
    %157 = vmatpush1.msra.mxu0 0.0
    %158 = vmatprep.mubr.f32.mxu0 0.0
    %159 = vmatmul.mubr.f32.gmra.mrb[0].mxu0 %v92
    %v160 = vpop.f32.mrb[0].mxu0
    %v161 = vadd.f32 0.0, %v160
    %v162 = vpop.f32.mrb[0].mxu0
    %v163 = vadd.f32 0.0, %v162
    %164 = vdwg.mxu0
    %vm165 = vcmask 785408
    %v167 = vsel %vm165, %v56, 0
    %169 = vmatprep.subr.mxu0 %v58
    %170 = vmatpush1.msra.mxu0 %v57
    %171 = vmatprep.subr.mxu0 %v60
    %172 = vmatpush1.msra.mxu0 %v59
    %173 = vmatprep.subr.mxu0 %v62
    %174 = vmatpush1.msra.mxu0 %v61
    %175 = vmatprep.subr.mxu0 %v64
    %176 = vmatpush1.msra.mxu0 %v63
    %177 = vmatprep.subr.mxu0 %v66
    %178 = vmatpush1.msra.mxu0 %v65
    %179 = vmatprep.subr.mxu0 %v68
    %180 = vmatpush1.msra.mxu0 %v67
    %181 = vmatprep.subr.mxu0 %v70
    %182 = vmatpush1.msra.mxu0 %v69
    %183 = vmatprep.subr.mxu0 %v72
    %184 = vmatpush1.msra.mxu0 %v71
    %185 = vmatprep.subr.mxu0 %v74
    %186 = vmatpush1.msra.mxu0 %v73
    %187 = vmatprep.subr.mxu0 %v76
    %188 = vmatpush1.msra.mxu0 %v75
    %189 = vmatprep.subr.mxu0 %v78
    %190 = vmatpush1.msra.mxu0 %v77
    %191 = vmatprep.subr.mxu0 %v80
    %192 = vmatpush1.msra.mxu0 %v79
    %193 = vmatprep.subr.mxu0 0.0
    %194 = vmatpush1.msra.mxu0 0.0
    %195 = vmatprep.subr.mxu0 0.0
    %196 = vmatpush1.msra.mxu0 0.0
    %197 = vmatprep.subr.mxu0 0.0
    %198 = vmatpush1.msra.mxu0 0.0
    %199 = vmatprep.subr.mxu0 0.0
    %200 = vmatpush1.msra.mxu0 0.0
    %201 = vmatprep.subr.mxu0 0.0
    %202 = vmatpush1.msra.mxu0 0.0
    %203 = vmatprep.subr.mxu0 0.0
    %204 = vmatpush1.msra.mxu0 0.0
    %205 = vmatprep.subr.mxu0 0.0
    %206 = vmatpush1.msra.mxu0 0.0
    %207 = vmatprep.subr.mxu0 0.0
    %208 = vmatpush1.msra.mxu0 0.0
    %209 = vmatprep.subr.mxu0 0.0
    %210 = vmatpush1.msra.mxu0 0.0
    %211 = vmatprep.subr.mxu0 0.0
    %212 = vmatpush1.msra.mxu0 0.0
    %213 = vmatprep.subr.mxu0 0.0
    %214 = vmatpush1.msra.mxu0 0.0
    %215 = vmatprep.subr.mxu0 0.0
    %216 = vmatpush1.msra.mxu0 0.0
    %217 = vmatprep.subr.mxu0 0.0
    %218 = vmatpush1.msra.mxu0 0.0
    %219 = vmatprep.subr.mxu0 0.0
    %220 = vmatpush1.msra.mxu0 0.0
    %221 = vmatprep.subr.mxu0 0.0
    %222 = vmatpush1.msra.mxu0 0.0
    %223 = vmatprep.subr.mxu0 0.0
    %224 = vmatpush1.msra.mxu0 0.0
    %225 = vmatprep.subr.mxu0 0.0
    %226 = vmatpush1.msra.mxu0 0.0
    %227 = vmatprep.subr.mxu0 0.0
    %228 = vmatpush1.msra.mxu0 0.0
    %229 = vmatprep.subr.mxu0 0.0
    %230 = vmatpush1.msra.mxu0 0.0
    %231 = vmatprep.subr.mxu0 0.0
    %232 = vmatpush1.msra.mxu0 0.0
    %233 = vmatprep.mubr.f32.mxu0 0.0
    %234 = vmatmul.mubr.f32.gmra.mrb[0].mxu0 %v167
    %v235 = vpop.f32.mrb[0].mxu0
    %v236 = vadd.f32 %v161, %v235
    %v237 = vpop.f32.mrb[0].mxu0
    %v238 = vadd.f32 %v163, %v237
    %239 = vdwg.mxu0
    %v240 = vld [vmem:[%s4] sm:$0x3]
    %v242 = vlaneseq
    %v243 = vshrl.u32 %v242, 7
    %v244 = vsub.s32 0, %v243
    %v245 = vrot.slane %v240, %v244
    %v246 = vlaneseq
    %v247 = vshrl.u32 %v246, 7
    %v248 = vsub.s32 1, %v247
    %v249 = vrot.slane %v240, %v248
    %v252 = vadd.f32 %v236, %v245
    %v253 = vadd.f32 %v238, %v249
    %v254 = vmax.f32 %v252, 0.0
    %v255 = vmax.f32 %v253, 0.0
    %v256 = vld [vmem:[%s5] sm:$0xff]
    %v257 = vld [vmem:[%s5 + $0x8] sm:$0xff]
    %v258 = vld [vmem:[%s5 + $0x10] sm:$0xff]
    %v259 = vld [vmem:[%s5 + $0x18] sm:$0xff]
    %v260 = vld [vmem:[%s5 + $0x20] sm:$0xff]
    %v261 = vld [vmem:[%s5 + $0x28] sm:$0xff]
    %v262 = vld [vmem:[%s5 + $0x30] sm:$0xff]
    %v263 = vld [vmem:[%s5 + $0x38] sm:$0xff]
    %v264 = vld [vmem:[%s5 + $0x40] sm:$0xff]
    %v265 = vld [vmem:[%s5 + $0x48] sm:$0xff]
    %v266 = vld [vmem:[%s5 + $0x50] sm:$0xff]
    %v267 = vld [vmem:[%s5 + $0x58] sm:$0xff]
    %v268 = vld [vmem:[%s5 + $0x60] sm:$0xff]
    %v269 = vld [vmem:[%s5 + $0x68] sm:$0xff]
    %v270 = vld [vmem:[%s5 + $0x70] sm:$0xff]
    %v271 = vld [vmem:[%s5 + $0x78] sm:$0xff]
    %v272 = vld [vmem:[%s5 + $0x80] sm:$0xff]
    %v273 = vld [vmem:[%s5 + $0x88] sm:$0xff]
    %v274 = vld [vmem:[%s5 + $0x90] sm:$0xff]
    %v275 = vld [vmem:[%s5 + $0x98] sm:$0xff]
    %v276 = vld [vmem:[%s5 + $0xa0] sm:$0xff]
    %v277 = vld [vmem:[%s5 + $0xa8] sm:$0xff]
    %v278 = vld [vmem:[%s5 + $0xb0] sm:$0xff]
    %v279 = vld [vmem:[%s5 + $0xb8] sm:$0xff]
    %v280 = vld [vmem:[%s5 + $0xc0] sm:$0xff]
    %v281 = vld [vmem:[%s5 + $0xc8] sm:$0xff]
    %v282 = vld [vmem:[%s5 + $0xd0] sm:$0xff]
    %v283 = vld [vmem:[%s5 + $0xd8] sm:$0xff]
    %v284 = vld [vmem:[%s5 + $0xe0] sm:$0xff]
    %v285 = vld [vmem:[%s5 + $0xe8] sm:$0xff]
    %v286 = vld [vmem:[%s5 + $0xf0] sm:$0xff]
    %v287 = vld [vmem:[%s5 + $0xf8] sm:$0xff]
    %v288 = vld [vmem:[%s5 + $0x100] sm:$0xff]
    %v289 = vld [vmem:[%s5 + $0x108] sm:$0xff]
    %v290 = vld [vmem:[%s5 + $0x110] sm:$0xff]
    %v291 = vld [vmem:[%s5 + $0x118] sm:$0xff]
    %v292 = vld [vmem:[%s5 + $0x120] sm:$0xff]
    %v293 = vld [vmem:[%s5 + $0x128] sm:$0xff]
    %v294 = vld [vmem:[%s5 + $0x130] sm:$0xff]
    %v295 = vld [vmem:[%s5 + $0x138] sm:$0xff]
    %v296 = vld [vmem:[%s5 + $0x140] sm:$0xff]
    %v297 = vld [vmem:[%s5 + $0x148] sm:$0xff]
    %v298 = vld [vmem:[%s5 + $0x150] sm:$0xff]
    %v299 = vld [vmem:[%s5 + $0x158] sm:$0xff]
    %v300 = vld [vmem:[%s5 + $0x160] sm:$0xff]
    %v301 = vld [vmem:[%s5 + $0x168] sm:$0xff]
    %v302 = vld [vmem:[%s5 + $0x170] sm:$0xff]
    %v303 = vld [vmem:[%s5 + $0x178] sm:$0xff]
    %v304 = vld [vmem:[%s5 + $0x180] sm:$0xff]
    %v305 = vld [vmem:[%s5 + $0x188] sm:$0xff]
    %v306 = vld [vmem:[%s5 + $0x190] sm:$0xff]
    %v307 = vld [vmem:[%s5 + $0x198] sm:$0xff]
    %v308 = vld [vmem:[%s5 + $0x1a0] sm:$0xff]
    %v309 = vld [vmem:[%s5 + $0x1a8] sm:$0xff]
    %v310 = vld [vmem:[%s5 + $0x1b0] sm:$0xff]
    %v311 = vld [vmem:[%s5 + $0x1b8] sm:$0xff]
    %v312 = vld [vmem:[%s5 + $0x1c0] sm:$0xff]
    %v313 = vld [vmem:[%s5 + $0x1c8] sm:$0xff]
    %v314 = vld [vmem:[%s5 + $0x1d0] sm:$0xff]
    %v315 = vld [vmem:[%s5 + $0x1d8] sm:$0xff]
    %v316 = vld [vmem:[%s5 + $0x1e0] sm:$0xff]
    %v317 = vld [vmem:[%s5 + $0x1e8] sm:$0xff]
    %v318 = vld [vmem:[%s5 + $0x1f0] sm:$0xff]
    %v319 = vld [vmem:[%s5 + $0x1f8] sm:$0xff]
    %v320 = vld [vmem:[%s6] sm:$0x3]
    %v322 = vlaneseq
    %v323 = vshrl.u32 %v322, 7
    %v324 = vsub.s32 0, %v323
    %v325 = vrot.slane %v320, %v324
    %v326 = vlaneseq
    %v327 = vshrl.u32 %v326, 7
    %v328 = vsub.s32 1, %v327
    %v329 = vrot.slane %v320, %v328
    %332 = vmatprep.subr.mxu0 %v257
    %333 = vmatpush1.msra.mxu0 %v256
    %334 = vmatprep.subr.mxu0 %v259
    %335 = vmatpush1.msra.mxu0 %v258
    %336 = vmatprep.subr.mxu0 %v261
    %337 = vmatpush1.msra.mxu0 %v260
    %338 = vmatprep.subr.mxu0 %v263
    %339 = vmatpush1.msra.mxu0 %v262
    %340 = vmatprep.subr.mxu0 %v265
    %341 = vmatpush1.msra.mxu0 %v264
    %342 = vmatprep.subr.mxu0 %v267
    %343 = vmatpush1.msra.mxu0 %v266
    %344 = vmatprep.subr.mxu0 %v269
    %345 = vmatpush1.msra.mxu0 %v268
    %346 = vmatprep.subr.mxu0 %v271
    %347 = vmatpush1.msra.mxu0 %v270
    %348 = vmatprep.subr.mxu0 %v273
    %349 = vmatpush1.msra.mxu0 %v272
    %350 = vmatprep.subr.mxu0 %v275
    %351 = vmatpush1.msra.mxu0 %v274
    %352 = vmatprep.subr.mxu0 %v277
    %353 = vmatpush1.msra.mxu0 %v276
    %354 = vmatprep.subr.mxu0 %v279
    %355 = vmatpush1.msra.mxu0 %v278
    %356 = vmatprep.subr.mxu0 %v281
    %357 = vmatpush1.msra.mxu0 %v280
    %358 = vmatprep.subr.mxu0 %v283
    %359 = vmatpush1.msra.mxu0 %v282
    %360 = vmatprep.subr.mxu0 %v285
    %361 = vmatpush1.msra.mxu0 %v284
    %362 = vmatprep.subr.mxu0 %v287
    %363 = vmatpush1.msra.mxu0 %v286
    %364 = vmatprep.subr.mxu0 %v289
    %365 = vmatpush1.msra.mxu0 %v288
    %366 = vmatprep.subr.mxu0 %v291
    %367 = vmatpush1.msra.mxu0 %v290
    %368 = vmatprep.subr.mxu0 %v293
    %369 = vmatpush1.msra.mxu0 %v292
    %370 = vmatprep.subr.mxu0 %v295
    %371 = vmatpush1.msra.mxu0 %v294
    %372 = vmatprep.subr.mxu0 %v297
    %373 = vmatpush1.msra.mxu0 %v296
    %374 = vmatprep.subr.mxu0 %v299
    %375 = vmatpush1.msra.mxu0 %v298
    %376 = vmatprep.subr.mxu0 %v301
    %377 = vmatpush1.msra.mxu0 %v300
    %378 = vmatprep.subr.mxu0 %v303
    %379 = vmatpush1.msra.mxu0 %v302
    %380 = vmatprep.subr.mxu0 %v305
    %381 = vmatpush1.msra.mxu0 %v304
    %382 = vmatprep.subr.mxu0 %v307
    %383 = vmatpush1.msra.mxu0 %v306
    %384 = vmatprep.subr.mxu0 %v309
    %385 = vmatpush1.msra.mxu0 %v308
    %386 = vmatprep.subr.mxu0 %v311
    %387 = vmatpush1.msra.mxu0 %v310
    %388 = vmatprep.subr.mxu0 %v313
    %389 = vmatpush1.msra.mxu0 %v312
    %390 = vmatprep.subr.mxu0 %v315
    %391 = vmatpush1.msra.mxu0 %v314
    %392 = vmatprep.subr.mxu0 %v317
    %393 = vmatpush1.msra.mxu0 %v316
    %394 = vmatprep.subr.mxu0 %v319
    %395 = vmatpush1.msra.mxu0 %v318
    %396 = vmatprep.mubr.f32.mxu0 %v255
    %397 = vmatmul.mubr.f32.gmra.mrb[0].mxu0 %v254
    %v398 = vpop.f32.mrb[0].mxu0
    %v399 = vadd.f32 %v325, %v398
    %v400 = vpop.f32.mrb[0].mxu0
    %v401 = vadd.f32 %v329, %v400
    %402 = vdwg.mxu0
    %v403 = vmax.f32 %v399, 0.0
    %v404 = vmax.f32 %v401, 0.0
    %v405 = vld [vmem:[%s7] sm:$0xff]
    %v406 = vld [vmem:[%s7 + $0x8] sm:$0xff]
    %v407 = vld [vmem:[%s7 + $0x10] sm:$0xff]
    %v408 = vld [vmem:[%s7 + $0x18] sm:$0xff]
    %v409 = vld [vmem:[%s7 + $0x20] sm:$0xff]
    %v410 = vld [vmem:[%s7 + $0x28] sm:$0xff]
    %v411 = vld [vmem:[%s7 + $0x30] sm:$0xff]
    %v412 = vld [vmem:[%s7 + $0x38] sm:$0xff]
    %v413 = vld [vmem:[%s7 + $0x40] sm:$0xff]
    %v414 = vld [vmem:[%s7 + $0x48] sm:$0xff]
    %v415 = vld [vmem:[%s7 + $0x50] sm:$0xff]
    %v416 = vld [vmem:[%s7 + $0x58] sm:$0xff]
    %v417 = vld [vmem:[%s7 + $0x60] sm:$0xff]
    %v418 = vld [vmem:[%s7 + $0x68] sm:$0xff]
    %v419 = vld [vmem:[%s7 + $0x70] sm:$0xff]
    %v420 = vld [vmem:[%s7 + $0x78] sm:$0xff]
    %v421 = vld [vmem:[%s7 + $0x80] sm:$0xff]
    %v422 = vld [vmem:[%s7 + $0x88] sm:$0xff]
    %v423 = vld [vmem:[%s7 + $0x90] sm:$0xff]
    %v424 = vld [vmem:[%s7 + $0x98] sm:$0xff]
    %v425 = vld [vmem:[%s7 + $0xa0] sm:$0xff]
    %v426 = vld [vmem:[%s7 + $0xa8] sm:$0xff]
    %v427 = vld [vmem:[%s7 + $0xb0] sm:$0xff]
    %v428 = vld [vmem:[%s7 + $0xb8] sm:$0xff]
    %v429 = vld [vmem:[%s7 + $0xc0] sm:$0xff]
    %v430 = vld [vmem:[%s7 + $0xc8] sm:$0xff]
    %v431 = vld [vmem:[%s7 + $0xd0] sm:$0xff]
    %v432 = vld [vmem:[%s7 + $0xd8] sm:$0xff]
    %v433 = vld [vmem:[%s7 + $0xe0] sm:$0xff]
    %v434 = vld [vmem:[%s7 + $0xe8] sm:$0xff]
    %v435 = vld [vmem:[%s7 + $0xf0] sm:$0xff]
    %v436 = vld [vmem:[%s7 + $0xf8] sm:$0xff]
    %v437 = vld [vmem:[%s8] sm:$0x1]
    %438 = vmatprep.subr.mxu0 0.0
    %439 = vmatpush1.msra.mxu0 %v405
    %440 = vmatprep.subr.mxu0 0.0
    %441 = vmatpush1.msra.mxu0 %v406
    %442 = vmatprep.subr.mxu0 0.0
    %443 = vmatpush1.msra.mxu0 %v407
    %444 = vmatprep.subr.mxu0 0.0
    %445 = vmatpush1.msra.mxu0 %v408
    %446 = vmatprep.subr.mxu0 0.0
    %447 = vmatpush1.msra.mxu0 %v409
    %448 = vmatprep.subr.mxu0 0.0
    %449 = vmatpush1.msra.mxu0 %v410
    %450 = vmatprep.subr.mxu0 0.0
    %451 = vmatpush1.msra.mxu0 %v411
    %452 = vmatprep.subr.mxu0 0.0
    %453 = vmatpush1.msra.mxu0 %v412
    %454 = vmatprep.subr.mxu0 0.0
    %455 = vmatpush1.msra.mxu0 %v413
    %456 = vmatprep.subr.mxu0 0.0
    %457 = vmatpush1.msra.mxu0 %v414
    %458 = vmatprep.subr.mxu0 0.0
    %459 = vmatpush1.msra.mxu0 %v415
    %460 = vmatprep.subr.mxu0 0.0
    %461 = vmatpush1.msra.mxu0 %v416
    %462 = vmatprep.subr.mxu0 0.0
    %463 = vmatpush1.msra.mxu0 %v417
    %464 = vmatprep.subr.mxu0 0.0
    %465 = vmatpush1.msra.mxu0 %v418
    %466 = vmatprep.subr.mxu0 0.0
    %467 = vmatpush1.msra.mxu0 %v419
    %468 = vmatprep.subr.mxu0 0.0
    %469 = vmatpush1.msra.mxu0 %v420
    %470 = vmatprep.subr.mxu0 0.0
    %471 = vmatpush1.msra.mxu0 %v421
    %472 = vmatprep.subr.mxu0 0.0
    %473 = vmatpush1.msra.mxu0 %v422
    %474 = vmatprep.subr.mxu0 0.0
    %475 = vmatpush1.msra.mxu0 %v423
    %476 = vmatprep.subr.mxu0 0.0
    %477 = vmatpush1.msra.mxu0 %v424
    %478 = vmatprep.subr.mxu0 0.0
    %479 = vmatpush1.msra.mxu0 %v425
    %480 = vmatprep.subr.mxu0 0.0
    %481 = vmatpush1.msra.mxu0 %v426
    %482 = vmatprep.subr.mxu0 0.0
    %483 = vmatpush1.msra.mxu0 %v427
    %484 = vmatprep.subr.mxu0 0.0
    %485 = vmatpush1.msra.mxu0 %v428
    %486 = vmatprep.subr.mxu0 0.0
    %487 = vmatpush1.msra.mxu0 %v429
    %488 = vmatprep.subr.mxu0 0.0
    %489 = vmatpush1.msra.mxu0 %v430
    %490 = vmatprep.subr.mxu0 0.0
    %491 = vmatpush1.msra.mxu0 %v431
    %492 = vmatprep.subr.mxu0 0.0
    %493 = vmatpush1.msra.mxu0 %v432
    %494 = vmatprep.subr.mxu0 0.0
    %495 = vmatpush1.msra.mxu0 %v433
    %496 = vmatprep.subr.mxu0 0.0
    %497 = vmatpush1.msra.mxu0 %v434
    %498 = vmatprep.subr.mxu0 0.0
    %499 = vmatpush1.msra.mxu0 %v435
    %500 = vmatprep.subr.mxu0 0.0
    %501 = vmatpush1.msra.mxu0 %v436
    %502 = vmatprep.mubr.f32.mxu0 %v404
    %503 = vmatmul.mubr.f32.gmra.mrb[0].mxu0 %v403
    %v504 = vpop.f32.mrb[0].mxu0
    %v505 = vadd.f32 %v437, %v504
    %v506 = vpop.f32.mrb[0].mxu0
    %507 = vdwg.mxu0
    %v508 = vld [vmem:[%s9] sm:$0xff]
    %v509 = vld [vmem:[%s9 + $0x8] sm:$0xff]
    %v510 = vld [vmem:[%s9 + $0x10] sm:$0xff]
    %v511 = vld [vmem:[%s9 + $0x18] sm:$0xff]
    %v512 = vld [vmem:[%s9 + $0x20] sm:$0xff]
    %v513 = vld [vmem:[%s9 + $0x28] sm:$0xff]
    %v514 = vld [vmem:[%s9 + $0x30] sm:$0xff]
    %v515 = vld [vmem:[%s9 + $0x38] sm:$0xff]
    %v516 = vld [vmem:[%s9 + $0x40] sm:$0xff]
    %v517 = vld [vmem:[%s9 + $0x48] sm:$0xff]
    %v518 = vld [vmem:[%s9 + $0x50] sm:$0xff]
    %v519 = vld [vmem:[%s9 + $0x58] sm:$0xff]
    %v520 = vld [vmem:[%s9 + $0x60] sm:$0xff]
    %v521 = vld [vmem:[%s9 + $0x68] sm:$0xff]
    %v522 = vld [vmem:[%s9 + $0x70] sm:$0xff]
    %v523 = vld [vmem:[%s9 + $0x78] sm:$0xff]
    %v524 = vld [vmem:[%s9 + $0x80] sm:$0xff]
    %v525 = vld [vmem:[%s9 + $0x88] sm:$0xff]
    %v526 = vld [vmem:[%s9 + $0x90] sm:$0xff]
    %v527 = vld [vmem:[%s9 + $0x98] sm:$0xff]
    %v528 = vld [vmem:[%s9 + $0xa0] sm:$0xff]
    %v529 = vld [vmem:[%s9 + $0xa8] sm:$0xff]
    %v530 = vld [vmem:[%s9 + $0xb0] sm:$0xff]
    %v531 = vld [vmem:[%s9 + $0xb8] sm:$0xff]
    %v532 = vld [vmem:[%s9 + $0xc0] sm:$0xff]
    %v533 = vld [vmem:[%s9 + $0xc8] sm:$0xff]
    %v534 = vld [vmem:[%s9 + $0xd0] sm:$0xff]
    %v535 = vld [vmem:[%s9 + $0xd8] sm:$0xff]
    %v536 = vld [vmem:[%s9 + $0xe0] sm:$0xff]
    %v537 = vld [vmem:[%s9 + $0xe8] sm:$0xff]
    %v538 = vld [vmem:[%s9 + $0xf0] sm:$0xff]
    %v539 = vld [vmem:[%s9 + $0xf8] sm:$0xff]
    %v540 = vld [vmem:[%s10] sm:$0x1]
    %541 = vmatprep.subr.mxu0 0.0
    %542 = vmatpush1.msra.mxu0 %v508
    %543 = vmatprep.subr.mxu0 0.0
    %544 = vmatpush1.msra.mxu0 %v509
    %545 = vmatprep.subr.mxu0 0.0
    %546 = vmatpush1.msra.mxu0 %v510
    %547 = vmatprep.subr.mxu0 0.0
    %548 = vmatpush1.msra.mxu0 %v511
    %549 = vmatprep.subr.mxu0 0.0
    %550 = vmatpush1.msra.mxu0 %v512
    %551 = vmatprep.subr.mxu0 0.0
    %552 = vmatpush1.msra.mxu0 %v513
    %553 = vmatprep.subr.mxu0 0.0
    %554 = vmatpush1.msra.mxu0 %v514
    %555 = vmatprep.subr.mxu0 0.0
    %556 = vmatpush1.msra.mxu0 %v515
    %557 = vmatprep.subr.mxu0 0.0
    %558 = vmatpush1.msra.mxu0 %v516
    %559 = vmatprep.subr.mxu0 0.0
    %560 = vmatpush1.msra.mxu0 %v517
    %561 = vmatprep.subr.mxu0 0.0
    %562 = vmatpush1.msra.mxu0 %v518
    %563 = vmatprep.subr.mxu0 0.0
    %564 = vmatpush1.msra.mxu0 %v519
    %565 = vmatprep.subr.mxu0 0.0
    %566 = vmatpush1.msra.mxu0 %v520
    %567 = vmatprep.subr.mxu0 0.0
    %568 = vmatpush1.msra.mxu0 %v521
    %569 = vmatprep.subr.mxu0 0.0
    %570 = vmatpush1.msra.mxu0 %v522
    %571 = vmatprep.subr.mxu0 0.0
    %572 = vmatpush1.msra.mxu0 %v523
    %573 = vmatprep.subr.mxu0 0.0
    %574 = vmatpush1.msra.mxu0 %v524
    %575 = vmatprep.subr.mxu0 0.0
    %576 = vmatpush1.msra.mxu0 %v525
    %577 = vmatprep.subr.mxu0 0.0
    %578 = vmatpush1.msra.mxu0 %v526
    %579 = vmatprep.subr.mxu0 0.0
    %580 = vmatpush1.msra.mxu0 %v527
    %581 = vmatprep.subr.mxu0 0.0
    %582 = vmatpush1.msra.mxu0 %v528
    %583 = vmatprep.subr.mxu0 0.0
    %584 = vmatpush1.msra.mxu0 %v529
    %585 = vmatprep.subr.mxu0 0.0
    %586 = vmatpush1.msra.mxu0 %v530
    %587 = vmatprep.subr.mxu0 0.0
    %588 = vmatpush1.msra.mxu0 %v531
    %589 = vmatprep.subr.mxu0 0.0
    %590 = vmatpush1.msra.mxu0 %v532
    %591 = vmatprep.subr.mxu0 0.0
    %592 = vmatpush1.msra.mxu0 %v533
    %593 = vmatprep.subr.mxu0 0.0
    %594 = vmatpush1.msra.mxu0 %v534
    %595 = vmatprep.subr.mxu0 0.0
    %596 = vmatpush1.msra.mxu0 %v535
    %597 = vmatprep.subr.mxu0 0.0
    %598 = vmatpush1.msra.mxu0 %v536
    %599 = vmatprep.subr.mxu0 0.0
    %600 = vmatpush1.msra.mxu0 %v537
    %601 = vmatprep.subr.mxu0 0.0
    %602 = vmatpush1.msra.mxu0 %v538
    %603 = vmatprep.subr.mxu0 0.0
    %604 = vmatpush1.msra.mxu0 %v539
    %605 = vmatprep.mubr.f32.mxu0 %v404
    %606 = vmatmul.mubr.f32.gmra.mrb[0].mxu0 %v403
    %v607 = vpop.f32.mrb[0].mxu0
    %v608 = vadd.f32 %v540, %v607
    %v609 = vpop.f32.mrb[0].mxu0
    %610 = vdwg.mxu0
    %v611 = vtanh.pop %v505
    %vm612 = vcmask 253952
    %613 = vst.msk [vmem:[#allocation5] sm:$0x1] %vm612, %v611
    %v614 = vxor.u32 %v608, 2147483648
    %v615 = vmul.f32 %v614, 1.442695
    %v616 = vpow.pop %v615
    %v617 = vadd.f32 %v616, 1.0
    %v618 = vrcp.pop %v617
    %v619 = vmul.f32 1.0, %v618
    %620 = vst.msk [vmem:[#allocation6] sm:$0x1] %vm612, %v619
    // Predicated region
    $region50: #{tpu_custom_call.1} parent=1 // pred_check
      _
    $region51: #{tpu_custom_call.1} parent=1 // pred_check_branch
      %622 = sbr.rel (0) target = $region53
    $region52: #{tpu_custom_call.1} parent=1 // pred_region
      %s624 = ssub.s32 16, 16
      %625 = vsyncadd [#allocation4], %s624
      %s627 = sshll.u32 [#allocation5], 4
      %s628 = int_to_ptr.vmem [resolvable:$true] %s627
      %630 = dma.vmem_to_hbm [thread:$0]  %s628, 16, %s11, [#allocation4]
    $region53: #{tpu_custom_call.1} parent=1 // pred_fallthru
      _
    // Predicated region
    $region54: #{tpu_custom_call.1} parent=1 // pred_check
      _
    $region55: #{tpu_custom_call.1} parent=1 // pred_check_branch
      %632 = sbr.rel (0) target = $region57
    $region56: #{tpu_custom_call.1} parent=1 // pred_region
      %s634 = ssub.s32 16, 16
      %635 = vsyncadd [#allocation7], %s634
      %s637 = sshll.u32 [#allocation6], 4
      %s638 = int_to_ptr.vmem [resolvable:$true] %s637
      %640 = dma.vmem_to_hbm [thread:$0]  %s638, 16, %s12, [#allocation7]
    $region57: #{tpu_custom_call.1} parent=1 // pred_fallthru
      _
    // Predicated region
    $region58: #{tpu_custom_call.1} parent=1 // pred_check
      _
    $region59: #{tpu_custom_call.1} parent=1 // pred_check_branch
      %642 = sbr.rel (0) target = $region61
    $region60: #{tpu_custom_call.1} parent=1 // pred_region
      %643 = dma.done [#allocation4], 16
    $region61: #{tpu_custom_call.1} parent=1 // pred_fallthru
      _
    // Predicated region
    $region62: #{tpu_custom_call.1} parent=1 // pred_check
      _
    $region63: #{tpu_custom_call.1} parent=1 // pred_check_branch
      %645 = sbr.rel (0) target = $region65
    $region64: #{tpu_custom_call.1} parent=1 // pred_region
      %646 = dma.done [#allocation7], 16
    $region65: #{tpu_custom_call.1} parent=1 // pred_fallthru
      _
    %647 = vsyncpa [#allocation3], 1
    %648 = vsyncpa [#allocation4], 1
    %649 = vsyncpa [#allocation7], 1

</llo_original>
